<compile_context>
chip_gen: v7x
topology: tpu7x:2x2x1
jax: 0.10.0
libtpu: 0.0.40
codegen_flags: <defaults>
</compile_context>

<pallas_src>
import functools

import jax
import jax.numpy as jnp
from jax.experimental import pallas as pl
from jax.experimental.pallas import tpu as pltpu

_LANE = 128


def _round_up(v, m):
    return (v + m - 1) // m * m


def _pad2d(a, rows, cols):
    r, c = a.shape
    return jnp.pad(a, ((0, rows - r), (0, cols - c)))


# ----------------------------- kernels -------------------------------------


def _transform_kernel(x_ref, ws_ref, wn_ref, xws_ref, xwn_ref):
    """Per row-tile: XWs = X @ W_self (f32), XWn = X @ W_neigh (bf16)."""
    x = x_ref[...]
    xws_ref[...] = jnp.dot(x, ws_ref[...], preferred_element_type=jnp.float32)
    xwn_ref[...] = jnp.dot(
        x, wn_ref[...], preferred_element_type=jnp.float32
    ).astype(jnp.bfloat16)


def _aggregate_kernel(a_ref, xwn_ref, xws_ref, b_ref, out_ref, acc_ref,
                      *, apply_relu: bool):
    """out[i] = relu?( sum_k A[i,k] @ XWn[k]  +  XWs[i]  +  b )."""
    k = pl.program_id(1)

    @pl.when(k == 0)
    def _():
        acc_ref[...] = jnp.zeros_like(acc_ref)

    acc_ref[...] += jnp.dot(a_ref[...], xwn_ref[...],
                            preferred_element_type=jnp.float32)

    @pl.when(k == pl.num_programs(1) - 1)
    def _():
        h = acc_ref[...] + xws_ref[...] + b_ref[...]
        if apply_relu:
            h = jnp.maximum(h, 0.0)
        out_ref[...] = h.astype(out_ref.dtype)


# ----------------------------- wrappers ------------------------------------


def sage_conv(adj_bf16, x, w_self, w_neigh, bias, *, apply_relu, tm=128, tk=128):
    """One SAGEConv('mean') layer on padded, lane-dense operands.

    adj_bf16: (Np, Np) bf16 row-mean-normalized adjacency
    x:        (Np, Fp) f32 node features (Fp multiple of 128)
    w_self/w_neigh: (Fp, Hp) f32, bias: (1, Hp) f32
    """
    n_pad, f_pad = x.shape
    h_pad = w_self.shape[1]
    assert n_pad % tm == 0 and n_pad % tk == 0

    # (1) small per-row-tile GEMMs: self path (f32) + neighbor pre-projection (bf16)
    xws, xwn = pl.pallas_call(
        _transform_kernel,
        out_shape=(jax.ShapeDtypeStruct((n_pad, h_pad), jnp.float32),
                   jax.ShapeDtypeStruct((n_pad, h_pad), jnp.bfloat16)),
        grid=(n_pad // tm,),
        in_specs=[
            pl.BlockSpec((tm, f_pad), lambda i: (i, 0)),
            pl.BlockSpec((f_pad, h_pad), lambda i: (0, 0)),
            pl.BlockSpec((f_pad, h_pad), lambda i: (0, 0)),
        ],
        out_specs=(pl.BlockSpec((tm, h_pad), lambda i: (i, 0)),
                   pl.BlockSpec((tm, h_pad), lambda i: (i, 0))),
        compiler_params=pltpu.CompilerParams(
            dimension_semantics=("parallel",)),
    )(x, w_self, w_neigh)

    # (2) tiled aggregation A @ XWn with f32 accumulator; bias/self/ReLU epilogue
    n_row_tiles = n_pad // tm
    cost = pl.CostEstimate(
        flops=2 * n_pad * n_pad * h_pad,
        transcendentals=0,
        bytes_accessed=(n_pad * n_pad * 2                    # A (bf16)
                        + n_row_tiles * n_pad * h_pad * 2    # XWn re-read per row tile
                        + n_pad * h_pad * 4                  # XWs
                        + n_pad * h_pad * 4),                # output
    )
    kernel = functools.partial(_aggregate_kernel, apply_relu=apply_relu)
    return pl.pallas_call(
        kernel,
        out_shape=jax.ShapeDtypeStruct((n_pad, h_pad), jnp.float32),
        grid=(n_pad // tm, n_pad // tk),
        in_specs=[
            pl.BlockSpec((tm, tk), lambda i, k: (i, k)),     # A tile (bf16)
            pl.BlockSpec((tk, h_pad), lambda i, k: (k, 0)),  # XWn K-slab (bf16)
            pl.BlockSpec((tm, h_pad), lambda i, k: (i, 0)),  # XWs row-slab (epilogue)
            pl.BlockSpec((1, h_pad), lambda i, k: (0, 0)),   # bias (epilogue)
        ],
        out_specs=pl.BlockSpec((tm, h_pad), lambda i, k: (i, 0)),
        scratch_shapes=[pltpu.VMEM((tm, h_pad), jnp.float32)],
        compiler_params=pltpu.CompilerParams(
            dimension_semantics=("parallel", "arbitrary"),
            vmem_limit_bytes=32 * 1024 * 1024),
        cost_estimate=cost,
    )(adj_bf16, xwn, xws, bias)


def graphsage_forward(adj, x, params, *, tm=128, tk=128):
    """2-layer GraphSAGE forward. `adj` is the dense row-mean-normalized
    adjacency (row i = mean over in-neighbors of node i)."""
    n, f = x.shape
    h_feats = params["w_self2"].shape[1]

    f_pad = _round_up(f, _LANE)
    h_pad = _round_up(h_feats, _LANE)
    n_pad = _round_up(n, max(tm, tk))

    adj_p = _pad2d(adj, n_pad, n_pad).astype(jnp.bfloat16)
    x_p = _pad2d(x, n_pad, f_pad)

    ws1 = _pad2d(params["w_self1"], f_pad, h_pad)
    wn1 = _pad2d(params["w_neigh1"], f_pad, h_pad)
    b1 = _pad2d(params["b1"], 1, h_pad)
    ws2 = _pad2d(params["w_self2"], h_pad, h_pad)
    wn2 = _pad2d(params["w_neigh2"], h_pad, h_pad)
    b2 = _pad2d(params["b2"], 1, h_pad)

    h = sage_conv(adj_p, x_p, ws1, wn1, b1, apply_relu=True, tm=tm, tk=tk)
    out = sage_conv(adj_p, h, ws2, wn2, b2, apply_relu=False, tm=tm, tk=tk)
    return out[:n, :h_feats]


# ----------------------------- references ----------------------------------


def graphsage_reference(adj, x, params):
    """Pure-f32 reference of the same math."""
    def layer(a, xx, ws, wn, b):
        return xx @ ws + a @ (xx @ wn) + b
    h = jnp.maximum(
        layer(adj, x, params["w_self1"], params["w_neigh1"], params["b1"]), 0.0)
    return layer(adj, h, params["w_self2"], params["w_neigh2"], params["b2"])


def graphsage_reference_quant(adj, x, params):
    """Reference that mimics the kernel's bf16 rounding of A and X@W_neigh."""
    a16 = adj.astype(jnp.bfloat16)

    def layer(xx, ws, wn, b):
        xwn = jnp.dot(xx, wn,
                      preferred_element_type=jnp.float32).astype(jnp.bfloat16)
        neigh = jnp.dot(a16, xwn, preferred_element_type=jnp.float32)
        return jnp.dot(xx, ws, preferred_element_type=jnp.float32) + neigh + b

    h = jnp.maximum(
        layer(x, params["w_self1"], params["w_neigh1"], params["b1"]), 0.0)
    return layer(h, params["w_self2"], params["w_neigh2"], params["b2"])


# ------------------------------- main ---------------------------------------


if __name__ == "__main__":
    N = 256          # number of graph nodes
    IN_FEATS = 32    # input feature dim
    H_FEATS = 32     # hidden feature dim

    key = jax.random.PRNGKey(0)
    k_adj, k_x, k1, k2, k3, k4, k5, k6 = jax.random.split(key, 8)

    # Synthetic directed graph -> dense 0/1 adjacency (row i = in-edges of i),
    # then mean-normalize rows (isolated nodes keep all-zero rows, matching
    # DGL's mean aggregator).
    adj01 = (jax.random.uniform(k_adj, (N, N)) < 0.1).astype(jnp.float32)
    deg = jnp.sum(adj01, axis=1, keepdims=True)
    adj_mean = jnp.where(deg > 0, adj01 / jnp.maximum(deg, 1.0), 0.0)

    x = jax.random.normal(k_x, (N, IN_FEATS), dtype=jnp.float32)

    # Weights stored as (in, out), i.e. transposed vs nn.Linear's (out, in).
    params = {
        "w_self1":  jax.random.normal(k1, (IN_FEATS, H_FEATS), jnp.float32) * 0.1,
        "w_neigh1": jax.random.normal(k2, (IN_FEATS, H_FEATS), jnp.float32) * 0.1,
        "b1":       jax.random.normal(k5, (1, H_FEATS), jnp.float32) * 0.1,
        "w_self2":  jax.random.normal(k3, (H_FEATS, H_FEATS), jnp.float32) * 0.1,
        "w_neigh2": jax.random.normal(k4, (H_FEATS, H_FEATS), jnp.float32) * 0.1,
        "b2":       jax.random.normal(k6, (1, H_FEATS), jnp.float32) * 0.1,
    }

    out = graphsage_forward(adj_mean, x, params, tm=128, tk=128)
    out = jax.block_until_ready(out)
    assert out.shape == (N, H_FEATS)

    # Tight check vs a reference with the same bf16 rounding as the kernel.
    ref_q = graphsage_reference_quant(adj_mean, x, params)
    assert jnp.allclose(out, ref_q, atol=1e-3, rtol=1e-3)

    # Loose check vs the pure-f32 reference (bf16 A / bf16 X@Wn operands).
    ref_f = graphsage_reference(adj_mean, x, params)
    assert jnp.allclose(out, ref_f, atol=5e-2, rtol=5e-2)

    print("KERNEL_OK")
</pallas_src>

<mosaic_0001>
module attributes {stable_mosaic.version = 11 : i64} {
  func.func @_transform_kernel(%arg0: i32, %arg1: memref<128x128xf32, #tpu.memory_space<vmem>>, %arg2: memref<128x128xf32, #tpu.memory_space<vmem>>, %arg3: memref<128x128xf32, #tpu.memory_space<vmem>>, %arg4: memref<128x128xf32, #tpu.memory_space<vmem>>, %arg5: memref<128x128xbf16, #tpu.memory_space<vmem>>) attributes {dimension_semantics = [#tpu.dimension_semantics<parallel>], iteration_bounds = array<i64: 2>, scalar_prefetch = 0 : i64, scratch_operands = 0 : i64, tpu.core_type = #tpu.core_type<tc>, window_params = [{transform_indices = @transform_0, window_bounds = array<i64: 128, 128>}, {pipeline_mode = #tpu.pipeline_mode<synchronous>, transform_indices = @transform_1, window_bounds = array<i64: 128, 128>}, {pipeline_mode = #tpu.pipeline_mode<synchronous>, transform_indices = @transform_2, window_bounds = array<i64: 128, 128>}, {transform_indices = @transform_3, window_bounds = array<i64: 128, 128>}, {transform_indices = @transform_4, window_bounds = array<i64: 128, 128>}]} {
    %c0 = arith.constant 0 : index
    %c0_0 = arith.constant 0 : index
    %0 = vector.load %arg1[%c0, %c0_0] : memref<128x128xf32, #tpu.memory_space<vmem>>, vector<128x128xf32>
    %c0_1 = arith.constant 0 : index
    %c0_2 = arith.constant 0 : index
    %1 = vector.load %arg2[%c0_1, %c0_2] : memref<128x128xf32, #tpu.memory_space<vmem>>, vector<128x128xf32>
    %cst = arith.constant dense<0.000000e+00> : vector<128x128xf32>
    %2 = tpu.matmul %0, %1, %cst {dimension_numbers = #tpu.dot_dimension_numbers<[1], [0], [0], [1], [0, 0, 1, 1], [], []>} : vector<128x128xf32>, vector<128x128xf32>, vector<128x128xf32> -> vector<128x128xf32>
    %c0_3 = arith.constant 0 : index
    %c0_4 = arith.constant 0 : index
    %3 = vector.load %arg4[%c0_3, %c0_4] : memref<128x128xf32, #tpu.memory_space<vmem>>, vector<128x128xf32>
    tpu.vector_store %arg4[%c0_3, %c0_4], %2 {strides = array<i32>} : memref<128x128xf32, #tpu.memory_space<vmem>>, vector<128x128xf32>,
    %c0_5 = arith.constant 0 : index
    %c0_6 = arith.constant 0 : index
    %4 = vector.load %arg3[%c0_5, %c0_6] : memref<128x128xf32, #tpu.memory_space<vmem>>, vector<128x128xf32>
    %cst_7 = arith.constant dense<0.000000e+00> : vector<128x128xf32>
    %5 = tpu.matmul %0, %4, %cst_7 {dimension_numbers = #tpu.dot_dimension_numbers<[1], [0], [0], [1], [0, 0, 1, 1], [], []>} : vector<128x128xf32>, vector<128x128xf32>, vector<128x128xf32> -> vector<128x128xf32>
    %6 = arith.truncf %5 : vector<128x128xf32> to vector<128x128xbf16>
    %c0_8 = arith.constant 0 : index
    %c0_9 = arith.constant 0 : index
    %7 = vector.load %arg5[%c0_8, %c0_9] : memref<128x128xbf16, #tpu.memory_space<vmem>>, vector<128x128xbf16>
    tpu.vector_store %arg5[%c0_8, %c0_9], %6 {strides = array<i32>} : memref<128x128xbf16, #tpu.memory_space<vmem>>, vector<128x128xbf16>,
    return
  }
  func.func @transform_0(%arg0: i32) -> (i32, i32) {
    %c0_i32 = arith.constant 0 : i32
    %c0_i32_0 = arith.constant 0 : i32
    return %arg0, %c0_i32 : i32, i32
  }
  func.func @transform_1(%arg0: i32) -> (i32, i32) {
    %c0_i32 = arith.constant 0 : i32
    %c0_i32_0 = arith.constant 0 : i32
    %c0_i32_1 = arith.constant 0 : i32
    return %c0_i32, %c0_i32_0 : i32, i32
  }
  func.func @transform_2(%arg0: i32) -> (i32, i32) {
    %c0_i32 = arith.constant 0 : i32
    %c0_i32_0 = arith.constant 0 : i32
    %c0_i32_1 = arith.constant 0 : i32
    return %c0_i32, %c0_i32_0 : i32, i32
  }
  func.func @transform_3(%arg0: i32) -> (i32, i32) {
    %c0_i32 = arith.constant 0 : i32
    %c0_i32_0 = arith.constant 0 : i32
    return %arg0, %c0_i32 : i32, i32
  }
  func.func @transform_4(%arg0: i32) -> (i32, i32) {
    %c0_i32 = arith.constant 0 : i32
    %c0_i32_0 = arith.constant 0 : i32
    return %arg0, %c0_i32 : i32, i32
  }
}

</mosaic_0001>

<llo_original>
// kernel: tpu_custom_call.1
$region0: #{tpu_custom_call.1}
  #allocation0 [shape = 'u32[]', space=smem, size = 0x4, offset = 0x4, fixed_abs, tag = 'smem constant byte address 0x4 - core index']
  #allocation1 [shape = 'u32[144,128]{1,0:T(1,128)}', space=vmem, size = 0x12000, scoped, tag = 'internal scratch']
  %s0 = inlined_call_operand.hbm [shape: f32[256,128], index: 0, kind: input, shape index: {}]
  %s1 = inlined_call_operand.hbm [shape: f32[128,128], index: 1, kind: input, shape index: {}]
  %s2 = inlined_call_operand.hbm [shape: f32[128,128], index: 2, kind: input, shape index: {}]
  %s3 = inlined_call_operand.hbm [shape: f32[256,128], index: 3, kind: output, shape index: {0}]
  %s4 = inlined_call_operand.hbm [shape: bf16[256,128], index: 4, kind: output, shape index: {1}]
  %5 = xla_tuple %s3, %s4
  %s6 = sld [smem:[#allocation0]]
  $region65: #{tpu_custom_call.1} parent=0
    _
  %s8 = ssub.s32 1, %s6
  %s9 = scalar_select 0, %s8, %s6
  $region1: #{tpu_custom_call.1} parent=0
    #allocation2 [shape = 'u8[131072]{0}', space=vmem, size = 0x20000, scoped, tag = 'input window, operand 0']
    #allocation3 [shape = 's32[2]{0}', space=sflag, size = 0x8, scoped, tag = 'scoped memory for tpu_custom_call.1']
    #allocation4 [shape = 's32[2]{0}', space=sflag, size = 0x8, scoped, tag = 'scoped memory for tpu_custom_call.1']
    #allocation5 [shape = 'u8[65536]{0}', space=vmem, size = 0x10000, scoped, tag = 'input window, operand 1, single buffered']
    #allocation6 [shape = 's32[1]{0}', space=sflag, size = 0x4, scoped, tag = 'scoped memory for tpu_custom_call.1']
    #allocation7 [shape = 'u8[65536]{0}', space=vmem, size = 0x10000, scoped, tag = 'input window, operand 2, single buffered']
    #allocation8 [shape = 'u8[131072]{0}', space=vmem, size = 0x20000, scoped, tag = 'output window, operand 0']
    #allocation9 [shape = 'u8[65536]{0}', space=vmem, size = 0x10000, scoped, tag = 'output window, operand 1']
    #allocation10 [shape = 's32[2]{0}', space=sflag, size = 0x8, scoped, tag = 'scoped memory for tpu_custom_call.1']
    %10 = vsyncpa [#allocation3], 0
    %s11 = scalar_lea.sflag [#allocation3], 1
    %12 = vsyncpa %s11, 0
    %13 = vsyncpa [#allocation6], 0
    %14 = vsyncpa [#allocation4], 0
    %s15 = scalar_lea.sflag [#allocation4], 1
    %16 = vsyncpa %s15, 0
    %17 = vsyncpa [#allocation10], 0
    %s18 = scalar_lea.sflag [#allocation10], 1
    %19 = vsyncpa %s18, 0
    loop: start=0, step=1, limit=4
    $region2: #{tpu_custom_call.1} parent=1 // loop_pre_header
      _
    $region3: #{tpu_custom_call.1} parent=1 // loop_header
      %s21 = sphi 0, %s25
      %p22 = scmp.ge.s32.totalorder %s21, 4
      %s31 = sphi 0, %s33
      %s34 = sphi 0, %s31
      %s35 = sphi 0, %s34
      %s51 = sphi 0, %s35
      %s55 = sphi 0, %s55
      %s57 = sphi 0, %s55
      %s58 = sphi 0, %s57
      %s72 = sphi 0, %s58
      %s76 = sphi 0, %s76
      %s78 = sphi 0, %s76
      %s79 = sphi 0, %s78
      %s93 = sphi 0, %s79
      %s99 = sphi 0, %s101
      %s102 = sphi 0, %s99
      %s103 = sphi 0, %s102
      %s119 = sphi 0, %s103
      %s125 = sphi 0, %s127
      %s128 = sphi 0, %s125
      %s129 = sphi 0, %s128
      %s145 = sphi 0, %s129
    $region4: #{tpu_custom_call.1} parent=1 // loop_header_branch
      %24 = sbr.rel (%p22) target = $region8
    $region5: #{tpu_custom_call.1} parent=1 // loop_body
      %s26 = ssub.s32 %s21, 1
      %s27 = ssub.s32 %s21, 2
      %s28 = sadd.s32 %s21, 1
      %s29 = ssub.s32 %s21, %s28
      %p30 = scmp.eq.s32.totalorder %s29, 0
      %s32 = sadd.s32 %s31, 1
      %s33 = scalar_select %p30, %s31, %s32
      %p36 = pneg %p30
      %p37 = scmp.eq.s32.totalorder %s21, 1
      %p38 = por %p36, %p37
      %p39 = scmp.ne.s32.totalorder %s31, %s34
      %p40 = scmp.eq.s32.totalorder %s21, 0
      %p41 = por %p39, %p40
      %p42 = scmp.ne.s32.totalorder %s31, %s34
      %p43 = scmp.eq.s32.totalorder %s26, 1
      %p44 = por %p42, %p43
      %p45 = scmp.ne.s32.totalorder %s34, %s35
      %p46 = scmp.eq.s32.totalorder %s26, 0
      %p47 = por %p45, %p46
      %p48 = scmp.ne.s32.totalorder %s34, %s35
      %p49 = scmp.eq.s32.totalorder %s27, 1
      %p50 = por %p48, %p49
      %p52 = scmp.ne.s32.totalorder %s35, %s51
      %p53 = scmp.eq.s32.totalorder %s27, 0
      %p54 = por %p52, %p53
      %s56 = sadd.s32 %s55, 1
      %p59 = scmp.eq.s32.totalorder %s21, 1
      %p60 = scmp.ne.s32.totalorder %s55, %s57
      %p61 = scmp.eq.s32.totalorder %s21, 0
      %p62 = por %p60, %p61
      %p63 = scmp.ne.s32.totalorder %s55, %s57
      %p64 = scmp.eq.s32.totalorder %s26, 1
      %p65 = por %p63, %p64
      %p66 = scmp.ne.s32.totalorder %s57, %s58
      %p67 = scmp.eq.s32.totalorder %s26, 0
      %p68 = por %p66, %p67
      %p69 = scmp.ne.s32.totalorder %s57, %s58
      %p70 = scmp.eq.s32.totalorder %s27, 1
      %p71 = por %p69, %p70
      %p73 = scmp.ne.s32.totalorder %s58, %s72
      %p74 = scmp.eq.s32.totalorder %s27, 0
      %p75 = por %p73, %p74
      %s77 = sadd.s32 %s76, 1
      %p80 = scmp.eq.s32.totalorder %s21, 1
      %p81 = scmp.ne.s32.totalorder %s76, %s78
      %p82 = scmp.eq.s32.totalorder %s21, 0
      %p83 = por %p81, %p82
      %p84 = scmp.ne.s32.totalorder %s76, %s78
      %p85 = scmp.eq.s32.totalorder %s26, 1
      %p86 = por %p84, %p85
      %p87 = scmp.ne.s32.totalorder %s78, %s79
      %p88 = scmp.eq.s32.totalorder %s26, 0
      %p89 = por %p87, %p88
      %p90 = scmp.ne.s32.totalorder %s78, %s79
      %p91 = scmp.eq.s32.totalorder %s27, 1
      %p92 = por %p90, %p91
      %p94 = scmp.ne.s32.totalorder %s79, %s93
      %p95 = scmp.eq.s32.totalorder %s27, 0
      %p96 = por %p94, %p95
      %s97 = ssub.s32 %s21, %s28
      %p98 = scmp.eq.s32.totalorder %s97, 0
      %s100 = sadd.s32 %s99, 1
      %s101 = scalar_select %p98, %s99, %s100
      %p104 = pneg %p98
      %p105 = scmp.eq.s32.totalorder %s21, 1
      %p106 = por %p104, %p105
      %p107 = scmp.ne.s32.totalorder %s99, %s102
      %p108 = scmp.eq.s32.totalorder %s21, 0
      %p109 = por %p107, %p108
      %p110 = scmp.ne.s32.totalorder %s99, %s102
      %p111 = scmp.eq.s32.totalorder %s26, 1
      %p112 = por %p110, %p111
      %p113 = scmp.ne.s32.totalorder %s102, %s103
      %p114 = scmp.eq.s32.totalorder %s26, 0
      %p115 = por %p113, %p114
      %p116 = scmp.ne.s32.totalorder %s102, %s103
      %p117 = scmp.eq.s32.totalorder %s27, 1
      %p118 = por %p116, %p117
      %p120 = scmp.ne.s32.totalorder %s103, %s119
      %p121 = scmp.eq.s32.totalorder %s27, 0
      %p122 = por %p120, %p121
      %s123 = ssub.s32 %s21, %s28
      %p124 = scmp.eq.s32.totalorder %s123, 0
      %s126 = sadd.s32 %s125, 1
      %s127 = scalar_select %p124, %s125, %s126
      %p130 = pneg %p124
      %p131 = scmp.eq.s32.totalorder %s21, 1
      %p132 = por %p130, %p131
      %p133 = scmp.ne.s32.totalorder %s125, %s128
      %p134 = scmp.eq.s32.totalorder %s21, 0
      %p135 = por %p133, %p134
      %p136 = scmp.ne.s32.totalorder %s125, %s128
      %p137 = scmp.eq.s32.totalorder %s26, 1
      %p138 = por %p136, %p137
      %p139 = scmp.ne.s32.totalorder %s128, %s129
      %p140 = scmp.eq.s32.totalorder %s26, 0
      %p141 = por %p139, %p140
      %p142 = scmp.ne.s32.totalorder %s128, %s129
      %p143 = scmp.eq.s32.totalorder %s27, 1
      %p144 = por %p142, %p143
      %p146 = scmp.ne.s32.totalorder %s129, %s145
      %p147 = scmp.eq.s32.totalorder %s27, 0
      %p148 = por %p146, %p147
      %p149 = scmp.le.s32.totalorder 1, %s21
      %p150 = scmp.lt.s32.totalorder %s21, 3
      %p151 = pnand %p149, %p150
      %p152 = pneg %p151
      // Predicated region
      $region9: #{tpu_custom_call.1} parent=5 // pred_check
        _
      $region10: #{tpu_custom_call.1} parent=5 // pred_check_branch
        %154 = sbr.rel (%p151) target = $region12
      $region11: #{tpu_custom_call.1} parent=5 // pred_region
        %s155 = ssub.s32 %s21, 1
        // Predicated region
        $region13: #{tpu_custom_call.1} parent=11 // pred_check
          %p156 = pneg %p68
        $region14: #{tpu_custom_call.1} parent=11 // pred_check_branch
          %158 = sbr.rel (%p156) target = $region16
        $region15: #{tpu_custom_call.1} parent=11 // pred_region
          %s160 = ssub.s32 2048, 2048
          %161 = vsyncadd [#allocation6], %s160
          %s162 = sshll.u32 [#allocation5], 4
          %s163 = int_to_ptr.vmem [resolvable:$true] %s162
          %168 = dma.hbm_to_vmem [thread:$0]  %s1, 2048, %s163, [#allocation6], 128, 128, 8
        $region16: #{tpu_custom_call.1} parent=11 // pred_fallthru
          _
        // Predicated region
        $region17: #{tpu_custom_call.1} parent=11 // pred_check
          %p169 = pneg %p89
        $region18: #{tpu_custom_call.1} parent=11 // pred_check_branch
          %171 = sbr.rel (%p169) target = $region20
        $region19: #{tpu_custom_call.1} parent=11 // pred_region
          %s173 = ssub.s32 2048, 2048
          %174 = vsyncadd [#allocation6], %s173
          %s175 = sshll.u32 [#allocation7], 4
          %s176 = int_to_ptr.vmem [resolvable:$true] %s175
          %181 = dma.hbm_to_vmem [thread:$0]  %s2, 2048, %s176, [#allocation6], 128, 128, 8
        $region20: #{tpu_custom_call.1} parent=11 // pred_fallthru
          _
      $region12: #{tpu_custom_call.1} parent=5 // pred_fallthru
        _
      %p182 = scmp.lt.s32.totalorder %s21, 2
      // Predicated region
      $region21: #{tpu_custom_call.1} parent=5 // pred_check
        %p183 = pneg %p182
      $region22: #{tpu_custom_call.1} parent=5 // pred_check_branch
        %185 = sbr.rel (%p183) target = $region24
      $region23: #{tpu_custom_call.1} parent=5 // pred_region
        // Predicated region
        $region25: #{tpu_custom_call.1} parent=23 // pred_check
          %p186 = pneg %p41
        $region26: #{tpu_custom_call.1} parent=23 // pred_check_branch
          %188 = sbr.rel (%p186) target = $region28
        $region27: #{tpu_custom_call.1} parent=23 // pred_region
          %s189 = sand.u32 %s31, 1
          %s190 = scalar_lea.sflag [#allocation3], %s189
          %s191 = sand.u32 %s31, 1
          %s192 = smul.addr %s191, 128
          %s193 = scalar_lea.vmem [#allocation2], %s192
          %s194 = smul.u32 16, %s21
          %s196 = ssub.s32 2048, 2048
          %197 = vsyncadd %s190, %s196
          %s198 = smul.addr %s194, 128
          %s199 = scalar_lea.hbm %s0, %s198
          %s200 = sshll.u32 %s193, 4
          %s201 = int_to_ptr.vmem [resolvable:$true] %s200
          %206 = dma.hbm_to_vmem [thread:$0]  %s199, 2048, %s201, %s190, 128, 128, 8
        $region28: #{tpu_custom_call.1} parent=23 // pred_fallthru
          _
      $region24: #{tpu_custom_call.1} parent=5 // pred_fallthru
        _
      %p207 = scmp.le.s32.totalorder 1, %s21
      %p208 = scmp.lt.s32.totalorder %s21, 3
      %p209 = pnand %p207, %p208
      %p210 = pneg %p209
      // Predicated region
      $region29: #{tpu_custom_call.1} parent=5 // pred_check
        _
      $region30: #{tpu_custom_call.1} parent=5 // pred_check_branch
        %212 = sbr.rel (%p209) target = $region32
      $region31: #{tpu_custom_call.1} parent=5 // pred_region
        %s213 = ssub.s32 %s21, 1
        %s214 = sand.u32 %s34, 1
        %s215 = scalar_lea.sflag [#allocation3], %s214
        %s216 = sand.u32 %s34, 1
        %s217 = smul.addr %s216, 128
        %s218 = scalar_lea.vmem [#allocation2], %s217
        // Predicated region
        $region33: #{tpu_custom_call.1} parent=31 // pred_check
          %p219 = pneg %p47
        $region34: #{tpu_custom_call.1} parent=31 // pred_check_branch
          %221 = sbr.rel (%p219) target = $region36
        $region35: #{tpu_custom_call.1} parent=31 // pred_region
          %222 = dma.done %s215, 2048
        $region36: #{tpu_custom_call.1} parent=31 // pred_fallthru
          _
        // Predicated region
        $region37: #{tpu_custom_call.1} parent=31 // pred_check
          %p223 = pneg %p68
        $region38: #{tpu_custom_call.1} parent=31 // pred_check_branch
          %225 = sbr.rel (%p223) target = $region40
        $region39: #{tpu_custom_call.1} parent=31 // pred_region
          %226 = dma.done [#allocation6], 2048
        $region40: #{tpu_custom_call.1} parent=31 // pred_fallthru
          _
        // Predicated region
        $region41: #{tpu_custom_call.1} parent=31 // pred_check
          %p227 = pneg %p89
        $region42: #{tpu_custom_call.1} parent=31 // pred_check_branch
          %229 = sbr.rel (%p227) target = $region44
        $region43: #{tpu_custom_call.1} parent=31 // pred_region
          %230 = dma.done [#allocation6], 2048
        $region44: #{tpu_custom_call.1} parent=31 // pred_fallthru
          _
        %s231 = sand.u32 %s34, 1
        %s232 = scalar_lea.sflag [#allocation3], %s231
        %s233 = sand.u32 %s34, 1
        %s234 = smul.addr %s233, 128
        %s235 = scalar_lea.vmem [#allocation2], %s234
        %p236 = pneg %p47
        %p237 = pneg %p44
        %p238 = pneg %p68
        %p239 = pneg %p65
        %p240 = pneg %p89
        %p241 = pneg %p86
        %p242 = pneg %p115
        %p243 = pneg %p112
        %s244 = sand.u32 %s102, 1
        %s245 = scalar_lea.sflag [#allocation4], %s244
        %s246 = sand.u32 %s102, 1
        %s247 = smul.addr %s246, 128
        %s248 = scalar_lea.vmem [#allocation8], %s247
        %p249 = pneg %p141
        %p250 = pneg %p138
        %s251 = sand.u32 %s128, 1
        %s252 = scalar_lea.sflag [#allocation10], %s251
        %s253 = sand.u32 %s128, 1
        %s254 = smul.addr %s253, 64
        %s255 = scalar_lea.vmem [#allocation9], %s254
        %s256 = smul.u32 16, %s26
        %s257 = smul.u32 16, %s26
        %s258 = smul.u32 16, %s26
        %v259 = vld [vmem:[%s218] sm:$0xff]
        %v260 = vld [vmem:[%s218 + $0x8] sm:$0xff]
        %v261 = vld [vmem:[%s218 + $0x10] sm:$0xff]
        %v262 = vld [vmem:[%s218 + $0x18] sm:$0xff]
        %v263 = vld [vmem:[%s218 + $0x20] sm:$0xff]
        %v264 = vld [vmem:[%s218 + $0x28] sm:$0xff]
        %v265 = vld [vmem:[%s218 + $0x30] sm:$0xff]
        %v266 = vld [vmem:[%s218 + $0x38] sm:$0xff]
        %v267 = vld [vmem:[%s218 + $0x40] sm:$0xff]
        %v268 = vld [vmem:[%s218 + $0x48] sm:$0xff]
        %v269 = vld [vmem:[%s218 + $0x50] sm:$0xff]
        %v270 = vld [vmem:[%s218 + $0x58] sm:$0xff]
        %v271 = vld [vmem:[%s218 + $0x60] sm:$0xff]
        %v272 = vld [vmem:[%s218 + $0x68] sm:$0xff]
        %v273 = vld [vmem:[%s218 + $0x70] sm:$0xff]
        %v274 = vld [vmem:[%s218 + $0x78] sm:$0xff]
        %v275 = vld [vmem:[#allocation5] sm:$0xff]
        %v276 = vld [vmem:[#allocation5 + $0x8] sm:$0xff]
        %v277 = vld [vmem:[#allocation5 + $0x10] sm:$0xff]
        %v278 = vld [vmem:[#allocation5 + $0x18] sm:$0xff]
        %v279 = vld [vmem:[#allocation5 + $0x20] sm:$0xff]
        %v280 = vld [vmem:[#allocation5 + $0x28] sm:$0xff]
        %v281 = vld [vmem:[#allocation5 + $0x30] sm:$0xff]
        %v282 = vld [vmem:[#allocation5 + $0x38] sm:$0xff]
        %v283 = vld [vmem:[#allocation5 + $0x40] sm:$0xff]
        %v284 = vld [vmem:[#allocation5 + $0x48] sm:$0xff]
        %v285 = vld [vmem:[#allocation5 + $0x50] sm:$0xff]
        %v286 = vld [vmem:[#allocation5 + $0x58] sm:$0xff]
        %v287 = vld [vmem:[#allocation5 + $0x60] sm:$0xff]
        %v288 = vld [vmem:[#allocation5 + $0x68] sm:$0xff]
        %v289 = vld [vmem:[#allocation5 + $0x70] sm:$0xff]
        %v290 = vld [vmem:[#allocation5 + $0x78] sm:$0xff]
        %291 = vmatprep.subr.mxu0 0.0
        %292 = vmatpush1.msra.mxu0 %v275
        %293 = vmatprep.subr.mxu0 0.0
        %294 = vmatpush1.msra.mxu0 %v276
        %295 = vmatprep.subr.mxu0 0.0
        %296 = vmatpush1.msra.mxu0 %v277
        %297 = vmatprep.subr.mxu0 0.0
        %298 = vmatpush1.msra.mxu0 %v278
        %299 = vmatprep.subr.mxu0 0.0
        %300 = vmatpush1.msra.mxu0 %v279
        %301 = vmatprep.subr.mxu0 0.0
        %302 = vmatpush1.msra.mxu0 %v280
        %303 = vmatprep.subr.mxu0 0.0
        %304 = vmatpush1.msra.mxu0 %v281
        %305 = vmatprep.subr.mxu0 0.0
        %306 = vmatpush1.msra.mxu0 %v282
        %307 = vmatprep.subr.mxu0 0.0
        %308 = vmatpush1.msra.mxu0 %v283
        %309 = vmatprep.subr.mxu0 0.0
        %310 = vmatpush1.msra.mxu0 %v284
        %311 = vmatprep.subr.mxu0 0.0
        %312 = vmatpush1.msra.mxu0 %v285
        %313 = vmatprep.subr.mxu0 0.0
        %314 = vmatpush1.msra.mxu0 %v286
        %315 = vmatprep.subr.mxu0 0.0
        %316 = vmatpush1.msra.mxu0 %v287
        %317 = vmatprep.subr.mxu0 0.0
        %318 = vmatpush1.msra.mxu0 %v288
        %319 = vmatprep.subr.mxu0 0.0
        %320 = vmatpush1.msra.mxu0 %v289
        %321 = vmatprep.subr.mxu0 0.0
        %322 = vmatpush1.msra.mxu0 %v290
        %323 = vmatprep.subr.mxu0 0.0
        %324 = vmatpush1.msra.mxu0 0.0
        %325 = vmatprep.subr.mxu0 0.0
        %326 = vmatpush1.msra.mxu0 0.0
        %327 = vmatprep.subr.mxu0 0.0
        %328 = vmatpush1.msra.mxu0 0.0
        %329 = vmatprep.subr.mxu0 0.0
        %330 = vmatpush1.msra.mxu0 0.0
        %331 = vmatprep.subr.mxu0 0.0
        %332 = vmatpush1.msra.mxu0 0.0
        %333 = vmatprep.subr.mxu0 0.0
        %334 = vmatpush1.msra.mxu0 0.0
        %335 = vmatprep.subr.mxu0 0.0
        %336 = vmatpush1.msra.mxu0 0.0
        %337 = vmatprep.subr.mxu0 0.0
        %338 = vmatpush1.msra.mxu0 0.0
        %339 = vmatprep.subr.mxu0 0.0
        %340 = vmatpush1.msra.mxu0 0.0
        %341 = vmatprep.subr.mxu0 0.0
        %342 = vmatpush1.msra.mxu0 0.0
        %343 = vmatprep.subr.mxu0 0.0
        %344 = vmatpush1.msra.mxu0 0.0
        %345 = vmatprep.subr.mxu0 0.0
        %346 = vmatpush1.msra.mxu0 0.0
        %347 = vmatprep.subr.mxu0 0.0
        %348 = vmatpush1.msra.mxu0 0.0
        %349 = vmatprep.subr.mxu0 0.0
        %350 = vmatpush1.msra.mxu0 0.0
        %351 = vmatprep.subr.mxu0 0.0
        %352 = vmatpush1.msra.mxu0 0.0
        %353 = vmatprep.subr.mxu0 0.0
        %354 = vmatpush1.msra.mxu0 0.0
        %355 = vmatprep.mubr.f32.mxu0 0.0
        %356 = vmatmul.mubr.f32.gmra.mrb[0].mxu0 %v259
        %v357 = vpop.f32.mrb[0].mxu0
        %v358 = vadd.f32 0.0, %v357
        %v359 = vpop.f32.mrb[0].mxu0
        %360 = vmatprep.mubr.f32.mxu0 0.0
        %361 = vmatmul.mubr.f32.gmra.mrb[0].mxu0 %v260
        %v362 = vpop.f32.mrb[0].mxu0
        %v363 = vadd.f32 0.0, %v362
        %v364 = vpop.f32.mrb[0].mxu0
        %365 = vmatprep.mubr.f32.mxu0 0.0
        %366 = vmatmul.mubr.f32.gmra.mrb[0].mxu0 %v261
        %v367 = vpop.f32.mrb[0].mxu0
        %v368 = vadd.f32 0.0, %v367
        %v369 = vpop.f32.mrb[0].mxu0
        %370 = vmatprep.mubr.f32.mxu0 0.0
        %371 = vmatmul.mubr.f32.gmra.mrb[0].mxu0 %v262
        %v372 = vpop.f32.mrb[0].mxu0
        %v373 = vadd.f32 0.0, %v372
        %v374 = vpop.f32.mrb[0].mxu0
        %375 = vmatprep.mubr.f32.mxu0 0.0
        %376 = vmatmul.mubr.f32.gmra.mrb[0].mxu0 %v263
        %v377 = vpop.f32.mrb[0].mxu0
        %v378 = vadd.f32 0.0, %v377
        %v379 = vpop.f32.mrb[0].mxu0
        %380 = vmatprep.mubr.f32.mxu0 0.0
        %381 = vmatmul.mubr.f32.gmra.mrb[0].mxu0 %v264
        %v382 = vpop.f32.mrb[0].mxu0
        %v383 = vadd.f32 0.0, %v382
        %v384 = vpop.f32.mrb[0].mxu0
        %385 = vmatprep.mubr.f32.mxu0 0.0
        %386 = vmatmul.mubr.f32.gmra.mrb[0].mxu0 %v265
        %v387 = vpop.f32.mrb[0].mxu0
        %v388 = vadd.f32 0.0, %v387
        %v389 = vpop.f32.mrb[0].mxu0
        %390 = vmatprep.mubr.f32.mxu0 0.0
        %391 = vmatmul.mubr.f32.gmra.mrb[0].mxu0 %v266
        %v392 = vpop.f32.mrb[0].mxu0
        %v393 = vadd.f32 0.0, %v392
        %v394 = vpop.f32.mrb[0].mxu0
        %395 = vmatprep.mubr.f32.mxu0 0.0
        %396 = vmatmul.mubr.f32.gmra.mrb[0].mxu0 %v267
        %v397 = vpop.f32.mrb[0].mxu0
        %v398 = vadd.f32 0.0, %v397
        %v399 = vpop.f32.mrb[0].mxu0
        %400 = vmatprep.mubr.f32.mxu0 0.0
        %401 = vmatmul.mubr.f32.gmra.mrb[0].mxu0 %v268
        %v402 = vpop.f32.mrb[0].mxu0
        %v403 = vadd.f32 0.0, %v402
        %v404 = vpop.f32.mrb[0].mxu0
        %405 = vmatprep.mubr.f32.mxu0 0.0
        %406 = vmatmul.mubr.f32.gmra.mrb[0].mxu0 %v269
        %v407 = vpop.f32.mrb[0].mxu0
        %v408 = vadd.f32 0.0, %v407
        %v409 = vpop.f32.mrb[0].mxu0
        %410 = vmatprep.mubr.f32.mxu0 0.0
        %411 = vmatmul.mubr.f32.gmra.mrb[0].mxu0 %v270
        %v412 = vpop.f32.mrb[0].mxu0
        %v413 = vadd.f32 0.0, %v412
        %v414 = vpop.f32.mrb[0].mxu0
        %415 = vmatprep.mubr.f32.mxu0 0.0
        %416 = vmatmul.mubr.f32.gmra.mrb[0].mxu0 %v271
        %v417 = vpop.f32.mrb[0].mxu0
        %v418 = vadd.f32 0.0, %v417
        %v419 = vpop.f32.mrb[0].mxu0
        %420 = vmatprep.mubr.f32.mxu0 0.0
        %421 = vmatmul.mubr.f32.gmra.mrb[0].mxu0 %v272
        %v422 = vpop.f32.mrb[0].mxu0
        %v423 = vadd.f32 0.0, %v422
        %v424 = vpop.f32.mrb[0].mxu0
        %425 = vmatprep.mubr.f32.mxu0 0.0
        %426 = vmatmul.mubr.f32.gmra.mrb[0].mxu0 %v273
        %v427 = vpop.f32.mrb[0].mxu0
        %v428 = vadd.f32 0.0, %v427
        %v429 = vpop.f32.mrb[0].mxu0
        %430 = vmatprep.mubr.f32.mxu0 0.0
        %431 = vmatmul.mubr.f32.gmra.mrb[0].mxu0 %v274
        %v432 = vpop.f32.mrb[0].mxu0
        %v433 = vadd.f32 0.0, %v432
        %v434 = vpop.f32.mrb[0].mxu0
        %435 = vdwg.mxu0
        %436 = vst [vmem:[%s248] sm:$0xff] %v358
        %437 = vst [vmem:[%s248 + $0x8] sm:$0xff] %v363
        %438 = vst [vmem:[%s248 + $0x10] sm:$0xff] %v368
        %439 = vst [vmem:[%s248 + $0x18] sm:$0xff] %v373
        %440 = vst [vmem:[%s248 + $0x20] sm:$0xff] %v378
        %441 = vst [vmem:[%s248 + $0x28] sm:$0xff] %v383
        %442 = vst [vmem:[%s248 + $0x30] sm:$0xff] %v388
        %443 = vst [vmem:[%s248 + $0x38] sm:$0xff] %v393
        %444 = vst [vmem:[%s248 + $0x40] sm:$0xff] %v398
        %445 = vst [vmem:[%s248 + $0x48] sm:$0xff] %v403
        %446 = vst [vmem:[%s248 + $0x50] sm:$0xff] %v408
        %447 = vst [vmem:[%s248 + $0x58] sm:$0xff] %v413
        %448 = vst [vmem:[%s248 + $0x60] sm:$0xff] %v418
        %449 = vst [vmem:[%s248 + $0x68] sm:$0xff] %v423
        %450 = vst [vmem:[%s248 + $0x70] sm:$0xff] %v428
        %451 = vst [vmem:[%s248 + $0x78] sm:$0xff] %v433
        %v452 = vld [vmem:[#allocation7] sm:$0xff]
        %v453 = vld [vmem:[#allocation7 + $0x8] sm:$0xff]
        %v454 = vld [vmem:[#allocation7 + $0x10] sm:$0xff]
        %v455 = vld [vmem:[#allocation7 + $0x18] sm:$0xff]
        %v456 = vld [vmem:[#allocation7 + $0x20] sm:$0xff]
        %v457 = vld [vmem:[#allocation7 + $0x28] sm:$0xff]
        %v458 = vld [vmem:[#allocation7 + $0x30] sm:$0xff]
        %v459 = vld [vmem:[#allocation7 + $0x38] sm:$0xff]
        %v460 = vld [vmem:[#allocation7 + $0x40] sm:$0xff]
        %v461 = vld [vmem:[#allocation7 + $0x48] sm:$0xff]
        %v462 = vld [vmem:[#allocation7 + $0x50] sm:$0xff]
        %v463 = vld [vmem:[#allocation7 + $0x58] sm:$0xff]
        %v464 = vld [vmem:[#allocation7 + $0x60] sm:$0xff]
        %v465 = vld [vmem:[#allocation7 + $0x68] sm:$0xff]
        %v466 = vld [vmem:[#allocation7 + $0x70] sm:$0xff]
        %v467 = vld [vmem:[#allocation7 + $0x78] sm:$0xff]
        %468 = vmatprep.subr.mxu0 0.0
        %469 = vmatpush1.msra.mxu0 %v452
        %470 = vmatprep.subr.mxu0 0.0
        %471 = vmatpush1.msra.mxu0 %v453
        %472 = vmatprep.subr.mxu0 0.0
        %473 = vmatpush1.msra.mxu0 %v454
        %474 = vmatprep.subr.mxu0 0.0
        %475 = vmatpush1.msra.mxu0 %v455
        %476 = vmatprep.subr.mxu0 0.0
        %477 = vmatpush1.msra.mxu0 %v456
        %478 = vmatprep.subr.mxu0 0.0
        %479 = vmatpush1.msra.mxu0 %v457
        %480 = vmatprep.subr.mxu0 0.0
        %481 = vmatpush1.msra.mxu0 %v458
        %482 = vmatprep.subr.mxu0 0.0
        %483 = vmatpush1.msra.mxu0 %v459
        %484 = vmatprep.subr.mxu0 0.0
        %485 = vmatpush1.msra.mxu0 %v460
        %486 = vmatprep.subr.mxu0 0.0
        %487 = vmatpush1.msra.mxu0 %v461
        %488 = vmatprep.subr.mxu0 0.0
        %489 = vmatpush1.msra.mxu0 %v462
        %490 = vmatprep.subr.mxu0 0.0
        %491 = vmatpush1.msra.mxu0 %v463
        %492 = vmatprep.subr.mxu0 0.0
        %493 = vmatpush1.msra.mxu0 %v464
        %494 = vmatprep.subr.mxu0 0.0
        %495 = vmatpush1.msra.mxu0 %v465
        %496 = vmatprep.subr.mxu0 0.0
        %497 = vmatpush1.msra.mxu0 %v466
        %498 = vmatprep.subr.mxu0 0.0
        %499 = vmatpush1.msra.mxu0 %v467
        %500 = vmatprep.subr.mxu0 0.0
        %501 = vmatpush1.msra.mxu0 0.0
        %502 = vmatprep.subr.mxu0 0.0
        %503 = vmatpush1.msra.mxu0 0.0
        %504 = vmatprep.subr.mxu0 0.0
        %505 = vmatpush1.msra.mxu0 0.0
        %506 = vmatprep.subr.mxu0 0.0
        %507 = vmatpush1.msra.mxu0 0.0
        %508 = vmatprep.subr.mxu0 0.0
        %509 = vmatpush1.msra.mxu0 0.0
        %510 = vmatprep.subr.mxu0 0.0
        %511 = vmatpush1.msra.mxu0 0.0
        %512 = vmatprep.subr.mxu0 0.0
        %513 = vmatpush1.msra.mxu0 0.0
        %514 = vmatprep.subr.mxu0 0.0
        %515 = vmatpush1.msra.mxu0 0.0
        %516 = vmatprep.subr.mxu0 0.0
        %517 = vmatpush1.msra.mxu0 0.0
        %518 = vmatprep.subr.mxu0 0.0
        %519 = vmatpush1.msra.mxu0 0.0
        %520 = vmatprep.subr.mxu0 0.0
        %521 = vmatpush1.msra.mxu0 0.0
        %522 = vmatprep.subr.mxu0 0.0
        %523 = vmatpush1.msra.mxu0 0.0
        %524 = vmatprep.subr.mxu0 0.0
        %525 = vmatpush1.msra.mxu0 0.0
        %526 = vmatprep.subr.mxu0 0.0
        %527 = vmatpush1.msra.mxu0 0.0
        %528 = vmatprep.subr.mxu0 0.0
        %529 = vmatpush1.msra.mxu0 0.0
        %530 = vmatprep.subr.mxu0 0.0
        %531 = vmatpush1.msra.mxu0 0.0
        %532 = vmatprep.mubr.f32.mxu0 0.0
        %533 = vmatmul.mubr.f32.gmra.mrb[0].mxu0 %v259
        %v534 = vpop.f32.mrb[0].mxu0
        %v535 = vadd.f32 0.0, %v534
        %v536 = vpop.f32.mrb[0].mxu0
        %537 = vmatprep.mubr.f32.mxu0 0.0
        %538 = vmatmul.mubr.f32.gmra.mrb[0].mxu0 %v260
        %v539 = vpop.f32.mrb[0].mxu0
        %v540 = vadd.f32 0.0, %v539
        %v541 = vpop.f32.mrb[0].mxu0
        %542 = vmatprep.mubr.f32.mxu0 0.0
        %543 = vmatmul.mubr.f32.gmra.mrb[0].mxu0 %v261
        %v544 = vpop.f32.mrb[0].mxu0
        %v545 = vadd.f32 0.0, %v544
        %v546 = vpop.f32.mrb[0].mxu0
        %547 = vmatprep.mubr.f32.mxu0 0.0
        %548 = vmatmul.mubr.f32.gmra.mrb[0].mxu0 %v262
        %v549 = vpop.f32.mrb[0].mxu0
        %v550 = vadd.f32 0.0, %v549
        %v551 = vpop.f32.mrb[0].mxu0
        %552 = vmatprep.mubr.f32.mxu0 0.0
        %553 = vmatmul.mubr.f32.gmra.mrb[0].mxu0 %v263
        %v554 = vpop.f32.mrb[0].mxu0
        %v555 = vadd.f32 0.0, %v554
        %v556 = vpop.f32.mrb[0].mxu0
        %557 = vmatprep.mubr.f32.mxu0 0.0
        %558 = vmatmul.mubr.f32.gmra.mrb[0].mxu0 %v264
        %v559 = vpop.f32.mrb[0].mxu0
        %v560 = vadd.f32 0.0, %v559
        %v561 = vpop.f32.mrb[0].mxu0
        %562 = vmatprep.mubr.f32.mxu0 0.0
        %563 = vmatmul.mubr.f32.gmra.mrb[0].mxu0 %v265
        %v564 = vpop.f32.mrb[0].mxu0
        %v565 = vadd.f32 0.0, %v564
        %v566 = vpop.f32.mrb[0].mxu0
        %567 = vmatprep.mubr.f32.mxu0 0.0
        %568 = vmatmul.mubr.f32.gmra.mrb[0].mxu0 %v266
        %v569 = vpop.f32.mrb[0].mxu0
        %v570 = vadd.f32 0.0, %v569
        %v571 = vpop.f32.mrb[0].mxu0
        %572 = vmatprep.mubr.f32.mxu0 0.0
        %573 = vmatmul.mubr.f32.gmra.mrb[0].mxu0 %v267
        %v574 = vpop.f32.mrb[0].mxu0
        %v575 = vadd.f32 0.0, %v574
        %v576 = vpop.f32.mrb[0].mxu0
        %577 = vmatprep.mubr.f32.mxu0 0.0
        %578 = vmatmul.mubr.f32.gmra.mrb[0].mxu0 %v268
        %v579 = vpop.f32.mrb[0].mxu0
        %v580 = vadd.f32 0.0, %v579
        %v581 = vpop.f32.mrb[0].mxu0
        %582 = vmatprep.mubr.f32.mxu0 0.0
        %583 = vmatmul.mubr.f32.gmra.mrb[0].mxu0 %v269
        %v584 = vpop.f32.mrb[0].mxu0
        %v585 = vadd.f32 0.0, %v584
        %v586 = vpop.f32.mrb[0].mxu0
        %587 = vmatprep.mubr.f32.mxu0 0.0
        %588 = vmatmul.mubr.f32.gmra.mrb[0].mxu0 %v270
        %v589 = vpop.f32.mrb[0].mxu0
        %v590 = vadd.f32 0.0, %v589
        %v591 = vpop.f32.mrb[0].mxu0
        %592 = vmatprep.mubr.f32.mxu0 0.0
        %593 = vmatmul.mubr.f32.gmra.mrb[0].mxu0 %v271
        %v594 = vpop.f32.mrb[0].mxu0
        %v595 = vadd.f32 0.0, %v594
        %v596 = vpop.f32.mrb[0].mxu0
        %597 = vmatprep.mubr.f32.mxu0 0.0
        %598 = vmatmul.mubr.f32.gmra.mrb[0].mxu0 %v272
        %v599 = vpop.f32.mrb[0].mxu0
        %v600 = vadd.f32 0.0, %v599
        %v601 = vpop.f32.mrb[0].mxu0
        %602 = vmatprep.mubr.f32.mxu0 0.0
        %603 = vmatmul.mubr.f32.gmra.mrb[0].mxu0 %v273
        %v604 = vpop.f32.mrb[0].mxu0
        %v605 = vadd.f32 0.0, %v604
        %v606 = vpop.f32.mrb[0].mxu0
        %607 = vmatprep.mubr.f32.mxu0 0.0
        %608 = vmatmul.mubr.f32.gmra.mrb[0].mxu0 %v274
        %v609 = vpop.f32.mrb[0].mxu0
        %v610 = vadd.f32 0.0, %v609
        %v611 = vpop.f32.mrb[0].mxu0
        %612 = vdwg.mxu0
        %v613 = vpack.c.bf16 %v540, %v535
        %v614 = vpack.c.bf16 %v550, %v545
        %v615 = vpack.c.bf16 %v560, %v555
        %v616 = vpack.c.bf16 %v570, %v565
        %v617 = vpack.c.bf16 %v580, %v575
        %v618 = vpack.c.bf16 %v590, %v585
        %v619 = vpack.c.bf16 %v600, %v595
        %v620 = vpack.c.bf16 %v610, %v605
        %v629 = vunpack.c.l.b16 %v613
        %v630 = vunpack.c.h.b16 %v613
        %v631 = vunpack.c.l.b16 %v614
        %v632 = vunpack.c.h.b16 %v614
        %v633 = vunpack.c.l.b16 %v615
        %v634 = vunpack.c.h.b16 %v615
        %v635 = vunpack.c.l.b16 %v616
        %v636 = vunpack.c.h.b16 %v616
        %v637 = vunpack.c.l.b16 %v617
        %v638 = vunpack.c.h.b16 %v617
        %v639 = vunpack.c.l.b16 %v618
        %v640 = vunpack.c.h.b16 %v618
        %v641 = vunpack.c.l.b16 %v619
        %v642 = vunpack.c.h.b16 %v619
        %v643 = vunpack.c.l.b16 %v620
        %v644 = vunpack.c.h.b16 %v620
        %v645 = vpack.c.b16 %v629, %v629
        %v646 = vpack.c.b16 %v630, %v630
        %v647 = vpack.c.b16 %v631, %v631
        %v648 = vpack.c.b16 %v632, %v632
        %v649 = vpack.c.b16 %v633, %v633
        %v650 = vpack.c.b16 %v634, %v634
        %v651 = vpack.c.b16 %v635, %v635
        %v652 = vpack.c.b16 %v636, %v636
        %v653 = vpack.c.b16 %v637, %v637
        %v654 = vpack.c.b16 %v638, %v638
        %v655 = vpack.c.b16 %v639, %v639
        %v656 = vpack.c.b16 %v640, %v640
        %v657 = vpack.c.b16 %v641, %v641
        %v658 = vpack.c.b16 %v642, %v642
        %v659 = vpack.c.b16 %v643, %v643
        %v660 = vpack.c.b16 %v644, %v644
        %677 = vst [vmem:[%s255] sm:$0xf] %v645
        %678 = vst [vmem:[%s255 + $0x4] sm:$0xf] %v646
        %679 = vst [vmem:[%s255 + $0x8] sm:$0xf] %v647
        %680 = vst [vmem:[%s255 + $0xc] sm:$0xf] %v648
        %681 = vst [vmem:[%s255 + $0x10] sm:$0xf] %v649
        %682 = vst [vmem:[%s255 + $0x14] sm:$0xf] %v650
        %683 = vst [vmem:[%s255 + $0x18] sm:$0xf] %v651
        %684 = vst [vmem:[%s255 + $0x1c] sm:$0xf] %v652
        %685 = vst [vmem:[%s255 + $0x20] sm:$0xf] %v653
        %686 = vst [vmem:[%s255 + $0x24] sm:$0xf] %v654
        %687 = vst [vmem:[%s255 + $0x28] sm:$0xf] %v655
        %688 = vst [vmem:[%s255 + $0x2c] sm:$0xf] %v656
        %689 = vst [vmem:[%s255 + $0x30] sm:$0xf] %v657
        %690 = vst [vmem:[%s255 + $0x34] sm:$0xf] %v658
        %691 = vst [vmem:[%s255 + $0x38] sm:$0xf] %v659
        %692 = vst [vmem:[%s255 + $0x3c] sm:$0xf] %v660
        %s693 = sand.u32 %s102, 1
        %s694 = scalar_lea.sflag [#allocation4], %s693
        %s695 = sand.u32 %s102, 1
        %s696 = smul.addr %s695, 128
        %s697 = scalar_lea.vmem [#allocation8], %s696
        %s698 = sand.u32 %s128, 1
        %s699 = scalar_lea.sflag [#allocation10], %s698
        %s700 = sand.u32 %s128, 1
        %s701 = smul.addr %s700, 64
        %s702 = scalar_lea.vmem [#allocation9], %s701
        // Predicated region
        $region45: #{tpu_custom_call.1} parent=31 // pred_check
          %p703 = pneg %p112
        $region46: #{tpu_custom_call.1} parent=31 // pred_check_branch
          %705 = sbr.rel (%p703) target = $region48
        $region47: #{tpu_custom_call.1} parent=31 // pred_region
          %s706 = smul.u32 16, %s26
          %s708 = ssub.s32 2048, 2048
          %709 = vsyncadd %s694, %s708
          %s710 = smul.addr %s706, 128
          %s711 = scalar_lea.hbm %s3, %s710
          %s712 = sshll.u32 %s697, 4
          %s713 = int_to_ptr.vmem [resolvable:$true] %s712
          %718 = dma.vmem_to_hbm [thread:$0]  %s713, 2048, %s711, %s694, 128, 128, 8
        $region48: #{tpu_custom_call.1} parent=31 // pred_fallthru
          _
        // Predicated region
        $region49: #{tpu_custom_call.1} parent=31 // pred_check
          %p719 = pneg %p138
        $region50: #{tpu_custom_call.1} parent=31 // pred_check_branch
          %721 = sbr.rel (%p719) target = $region52
        $region51: #{tpu_custom_call.1} parent=31 // pred_region
          %s722 = smul.u32 16, %s26
          %s724 = ssub.s32 1024, 1024
          %725 = vsyncadd %s699, %s724
          %s726 = smul.addr %s722, 64
          %s727 = scalar_lea.hbm %s4, %s726
          %s728 = sshll.u32 %s702, 4
          %s729 = int_to_ptr.vmem [resolvable:$true] %s728
          %734 = dma.vmem_to_hbm [thread:$0]  %s729, 1024, %s727, %s699, 64, 64, 4
        $region52: #{tpu_custom_call.1} parent=31 // pred_fallthru
          _
      $region32: #{tpu_custom_call.1} parent=5 // pred_fallthru
        _
      %p735 = scmp.le.s32.totalorder 2, %s21
      // Predicated region
      $region53: #{tpu_custom_call.1} parent=5 // pred_check
        %p736 = pneg %p735
      $region54: #{tpu_custom_call.1} parent=5 // pred_check_branch
        %738 = sbr.rel (%p736) target = $region56
      $region55: #{tpu_custom_call.1} parent=5 // pred_region
        %s739 = ssub.s32 %s21, 2
        // Predicated region
        $region57: #{tpu_custom_call.1} parent=55 // pred_check
          %p740 = pneg %p118
        $region58: #{tpu_custom_call.1} parent=55 // pred_check_branch
          %742 = sbr.rel (%p740) target = $region60
        $region59: #{tpu_custom_call.1} parent=55 // pred_region
          %s743 = sand.u32 %s103, 1
          %s744 = scalar_lea.sflag [#allocation4], %s743
          %s745 = sand.u32 %s103, 1
          %s746 = smul.addr %s745, 128
          %s747 = scalar_lea.vmem [#allocation8], %s746
          %748 = dma.done %s744, 2048
        $region60: #{tpu_custom_call.1} parent=55 // pred_fallthru
          _
        // Predicated region
        $region61: #{tpu_custom_call.1} parent=55 // pred_check
          %p749 = pneg %p144
        $region62: #{tpu_custom_call.1} parent=55 // pred_check_branch
          %751 = sbr.rel (%p749) target = $region64
        $region63: #{tpu_custom_call.1} parent=55 // pred_region
          %s752 = sand.u32 %s129, 1
          %s753 = scalar_lea.sflag [#allocation10], %s752
          %s754 = sand.u32 %s129, 1
          %s755 = smul.addr %s754, 64
          %s756 = scalar_lea.vmem [#allocation9], %s755
          %757 = dma.done %s753, 1024
        $region64: #{tpu_custom_call.1} parent=55 // pred_fallthru
          _
      $region56: #{tpu_custom_call.1} parent=5 // pred_fallthru
        _
    $region6: #{tpu_custom_call.1} parent=1 // loop_footer
      %s25 = sadd.s32 1, %s21
    $region7: #{tpu_custom_call.1} parent=1 // loop_footer_branch
      %20 = sbr.rel target = $region3
    $region8: #{tpu_custom_call.1} parent=1 // loop_exit
      _
    %758 = vsyncpa [#allocation3], 1
    %s759 = scalar_lea.sflag [#allocation3], 1
    %760 = vsyncpa %s759, 1
    %761 = vsyncpa [#allocation6], 1
    %762 = vsyncpa [#allocation4], 1
    %s763 = scalar_lea.sflag [#allocation4], 1
    %764 = vsyncpa %s763, 1
    %765 = vsyncpa [#allocation10], 1
    %s766 = scalar_lea.sflag [#allocation10], 1
    %767 = vsyncpa %s766, 1

</llo_original>
